<compile_context>
chip_gen: v7x
topology: tpu7x:2x2x1
jax: 0.10.0
libtpu: 0.0.40
codegen_flags: <defaults>
</compile_context>

<pallas_src>
import jax
import jax.numpy as jnp
from jax.experimental import pallas as pl
from jax.experimental.pallas import tpu as pltpu


def _round_up(x, m):
    return (x + m - 1) // m * m


def _residual_linear_kernel(x_mm_ref, w_ref, b_ref, x_res_ref, o_ref, acc_ref):
    """Fused residual: o = x @ W + b + x, K-tiled with f32 accumulation."""
    k = pl.program_id(2)

    @pl.when(k == 0)
    def _():
        acc_ref[...] = jnp.zeros_like(acc_ref)

    acc_ref[...] += jnp.dot(
        x_mm_ref[...], w_ref[...], preferred_element_type=jnp.float32
    )

    @pl.when(k == pl.num_programs(2) - 1)
    def _():
        # Bias + residual only once, at finalize (not once per K step).
        y = acc_ref[...] + b_ref[...].astype(jnp.float32)
        y = y + x_res_ref[...].astype(jnp.float32)
        o_ref[...] = y.astype(o_ref.dtype)


def residual_linear(x, w, b, *, tm=256, tn=256, tk=512,
                    compute_dtype=jnp.bfloat16):
    """Residual.forward(x) = fn(x) + x with fn = Linear(W, b).

    x: (B, S, H), w: (H, H), b: (H,).  Rows (B*S) and features (H) are padded
    to tile multiples in the wrapper so the kernel always sees lane-dense,
    (sublane,128)-aligned tiles; the result is sliced back to (B, S, H).
    """
    B, S, H = x.shape
    M = B * S
    out_dtype = x.dtype

    # Sublane alignment for the MXU-input dtype (bf16 packs 16 rows / vreg).
    row_align = 16 if jnp.dtype(compute_dtype).itemsize == 2 else 8

    # Lane-dense layout: pad H up to a multiple of 128.
    H_pad = _round_up(H, 128)
    tn = min(tn, H_pad)
    tk = min(tk, H_pad)
    while H_pad % tn:          # shrink to a divisor of H_pad (128 always works)
        tn -= 128
    while H_pad % tk:
        tk -= 128

    # Row tile: as large as requested, but no larger than the (aligned) input.
    tm = min(tm, _round_up(M, row_align))
    M_pad = _round_up(M, tm)

    # Wrapper-side padding (zeros are neutral for matmul, bias and residual).
    x2 = x.reshape(M, H)
    if (M_pad, H_pad) != (M, H):
        x2 = jnp.pad(x2, ((0, M_pad - M), (0, H_pad - H)))
    w_p = w if H_pad == H else jnp.pad(w, ((0, H_pad - H), (0, H_pad - H)))
    b_p = b if H_pad == H else jnp.pad(b, (0, H_pad - H))

    x_mm = x2.astype(compute_dtype)            # MXU input (bf16 by default)
    w_mm = w_p.astype(compute_dtype)
    b2 = b_p.reshape(1, H_pad).astype(jnp.float32)

    grid = (M_pad // tm, H_pad // tn, H_pad // tk)   # K axis last

    # Advisory cost estimate for XLA's scheduler.
    flops = 2 * M_pad * H_pad * H_pad
    bytes_accessed = int(
        x_mm.size * x_mm.dtype.itemsize
        + w_mm.size * w_mm.dtype.itemsize
        + x2.size * x2.dtype.itemsize
        + b2.size * b2.dtype.itemsize
        + M_pad * H_pad * jnp.dtype(out_dtype).itemsize
    )
    cost = pl.CostEstimate(flops=flops, transcendentals=0,
                           bytes_accessed=bytes_accessed)

    # VMEM budget: double-buffered tiles + f32 accumulator, with 2x headroom,
    # kept well under v7x's 64 MiB physical VMEM.
    cbytes = jnp.dtype(compute_dtype).itemsize
    obytes = jnp.dtype(out_dtype).itemsize
    xbytes = x2.dtype.itemsize
    vmem_needed = (
        2 * tm * tk * cbytes        # x matmul tiles
        + 2 * tk * tn * cbytes      # weight tiles
        + 2 * tm * tn * xbytes      # residual x tiles
        + 2 * tm * tn * obytes      # output tiles
        + 2 * tn * 4                # bias
        + tm * tn * 4               # f32 accumulator scratch
    )
    vmem_limit = int(min(100 * 1024 * 1024,
                         max(2 * vmem_needed, 16 * 1024 * 1024)))

    out2 = pl.pallas_call(
        _residual_linear_kernel,
        out_shape=jax.ShapeDtypeStruct((M_pad, H_pad), out_dtype),
        grid_spec=pltpu.PrefetchScalarGridSpec(
            num_scalar_prefetch=0,
            grid=grid,
            in_specs=[
                pl.BlockSpec((tm, tk), lambda i, j, k: (i, k)),   # x (matmul)
                pl.BlockSpec((tk, tn), lambda i, j, k: (k, j)),   # weight tile
                pl.BlockSpec((1, tn), lambda i, j, k: (0, j)),    # bias row
                pl.BlockSpec((tm, tn), lambda i, j, k: (i, j)),   # x (residual)
            ],
            out_specs=pl.BlockSpec((tm, tn), lambda i, j, k: (i, j)),
            scratch_shapes=[pltpu.VMEM((tm, tn), jnp.float32)],
        ),
        compiler_params=pltpu.CompilerParams(
            dimension_semantics=("parallel", "parallel", "arbitrary"),
            vmem_limit_bytes=vmem_limit,
        ),
        cost_estimate=cost,
    )(x_mm, w_mm, b2, x2)

    if (M_pad, H_pad) != (M, H):
        out2 = out2[:M, :H]
    return out2.reshape(B, S, H)


if __name__ == "__main__":
    # Small shapes consistent with an attention-block residual.
    B, S, H = 2, 8, 32

    key = jax.random.PRNGKey(0)
    kx, kw, kb = jax.random.split(key, 3)

    x = jax.random.normal(kx, (B, S, H), dtype=jnp.float32)
    # trunc_normal_-style deterministic init for the wrapped Linear fn.
    w = 0.02 * jax.random.truncated_normal(kw, -2.0, 2.0, (H, H), dtype=jnp.float32)
    b = jnp.zeros((H,), dtype=jnp.float32)

    # Pure-JAX reference: Residual.forward(x) = fn(x) + x
    ref = (x @ w + b) + x

    # Default path: bf16 MXU inputs, f32 accumulation (loosened tolerance).
    out = jax.block_until_ready(residual_linear(x, w, b))
    assert out.shape == x.shape and out.dtype == x.dtype
    assert jnp.allclose(out, ref, atol=5e-2, rtol=5e-2), "mismatch (bf16 path)"

    # f32-compute path: tight tolerance against the reference.
    out_f32 = jax.block_until_ready(
        residual_linear(x, w, b, compute_dtype=jnp.float32))
    assert jnp.allclose(out_f32, ref, atol=1e-5, rtol=1e-5), "mismatch (f32 path)"

    print("KERNEL_OK")
</pallas_src>

<mosaic_0001>
module attributes {stable_mosaic.version = 11 : i64} {
  func.func @_residual_linear_kernel(%arg0: i32, %arg1: i32, %arg2: i32, %arg3: memref<16x128xbf16, #tpu.memory_space<vmem>>, %arg4: memref<128x128xbf16, #tpu.memory_space<vmem>>, %arg5: memref<1x128xf32, #tpu.memory_space<vmem>>, %arg6: memref<16x128xf32, #tpu.memory_space<vmem>>, %arg7: memref<16x128xf32, #tpu.memory_space<vmem>>, %arg8: memref<16x128xf32, #tpu.memory_space<vmem>>) attributes {dimension_semantics = [#tpu.dimension_semantics<parallel>, #tpu.dimension_semantics<parallel>, #tpu.dimension_semantics<arbitrary>], iteration_bounds = array<i64: 1, 1, 1>, scalar_prefetch = 0 : i64, scratch_operands = 1 : i64, tpu.core_type = #tpu.core_type<tc>, window_params = [{transform_indices = @transform_0, window_bounds = array<i64: 16, 128>}, {transform_indices = @transform_1, window_bounds = array<i64: 128, 128>}, {transform_indices = @transform_2, window_bounds = array<i64: 1, 128>}, {transform_indices = @transform_3, window_bounds = array<i64: 16, 128>}, {transform_indices = @transform_4, window_bounds = array<i64: 16, 128>}]} {
    %c0_i32 = arith.constant 0 : i32
    %0 = arith.cmpi eq, %arg2, %c0_i32 : i32
    %1 = arith.extui %0 : i1 to i32
    %c0_i32_0 = arith.constant 0 : i32
    %2 = arith.cmpi ne, %1, %c0_i32_0 : i32
    scf.if %2 {
      %cst_10 = arith.constant 0.000000e+00 : f32
      %12 = vector.broadcast %cst_10 : f32 to vector<16x128xf32>
      %c0_11 = arith.constant 0 : index
      %c0_12 = arith.constant 0 : index
      %13 = vector.load %arg8[%c0_11, %c0_12] : memref<16x128xf32, #tpu.memory_space<vmem>>, vector<16x128xf32>
      tpu.vector_store %arg8[%c0_11, %c0_12], %12 {strides = array<i32>} : memref<16x128xf32, #tpu.memory_space<vmem>>, vector<16x128xf32>,
    } else {
    }
    %c0 = arith.constant 0 : index
    %c0_1 = arith.constant 0 : index
    %3 = vector.load %arg8[%c0, %c0_1] : memref<16x128xf32, #tpu.memory_space<vmem>>, vector<16x128xf32>
    %c0_2 = arith.constant 0 : index
    %c0_3 = arith.constant 0 : index
    %4 = vector.load %arg3[%c0_2, %c0_3] : memref<16x128xbf16, #tpu.memory_space<vmem>>, vector<16x128xbf16>
    %c0_4 = arith.constant 0 : index
    %c0_5 = arith.constant 0 : index
    %5 = vector.load %arg4[%c0_4, %c0_5] : memref<128x128xbf16, #tpu.memory_space<vmem>>, vector<128x128xbf16>
    %cst = arith.constant dense<0.000000e+00> : vector<16x128xf32>
    %6 = tpu.matmul %4, %5, %cst {dimension_numbers = #tpu.dot_dimension_numbers<[1], [0], [0], [1], [0, 0, 1, 1], [], []>} : vector<16x128xbf16>, vector<128x128xbf16>, vector<16x128xf32> -> vector<16x128xf32>
    %7 = arith.addf %3, %6 : vector<16x128xf32>
    %c0_6 = arith.constant 0 : index
    %c0_7 = arith.constant 0 : index
    %8 = vector.load %arg8[%c0_6, %c0_7] : memref<16x128xf32, #tpu.memory_space<vmem>>, vector<16x128xf32>
    tpu.vector_store %arg8[%c0_6, %c0_7], %7 {strides = array<i32>} : memref<16x128xf32, #tpu.memory_space<vmem>>, vector<16x128xf32>,
    %c0_i32_8 = arith.constant 0 : i32
    %9 = arith.cmpi eq, %arg2, %c0_i32_8 : i32
    %10 = arith.extui %9 : i1 to i32
    %c0_i32_9 = arith.constant 0 : i32
    %11 = arith.cmpi ne, %10, %c0_i32_9 : i32
    scf.if %11 {
      %c0_10 = arith.constant 0 : index
      %c0_11 = arith.constant 0 : index
      %12 = vector.load %arg8[%c0_10, %c0_11] : memref<16x128xf32, #tpu.memory_space<vmem>>, vector<16x128xf32>
      %c0_12 = arith.constant 0 : index
      %c0_13 = arith.constant 0 : index
      %13 = vector.load %arg5[%c0_12, %c0_13] : memref<1x128xf32, #tpu.memory_space<vmem>>, vector<1x128xf32>
      %14 = vector.broadcast %13 : vector<1x128xf32> to vector<16x128xf32>
      %15 = arith.addf %12, %14 : vector<16x128xf32>
      %c0_14 = arith.constant 0 : index
      %c0_15 = arith.constant 0 : index
      %16 = vector.load %arg6[%c0_14, %c0_15] : memref<16x128xf32, #tpu.memory_space<vmem>>, vector<16x128xf32>
      %17 = arith.addf %15, %16 : vector<16x128xf32>
      %c0_16 = arith.constant 0 : index
      %c0_17 = arith.constant 0 : index
      %18 = vector.load %arg7[%c0_16, %c0_17] : memref<16x128xf32, #tpu.memory_space<vmem>>, vector<16x128xf32>
      tpu.vector_store %arg7[%c0_16, %c0_17], %17 {strides = array<i32>} : memref<16x128xf32, #tpu.memory_space<vmem>>, vector<16x128xf32>,
    } else {
    }
    return
  }
  func.func @transform_0(%arg0: i32, %arg1: i32, %arg2: i32) -> (i32, i32) {
    %c0_i32 = arith.constant 0 : i32
    return %arg0, %arg2 : i32, i32
  }
  func.func @transform_1(%arg0: i32, %arg1: i32, %arg2: i32) -> (i32, i32) {
    %c0_i32 = arith.constant 0 : i32
    return %arg2, %arg1 : i32, i32
  }
  func.func @transform_2(%arg0: i32, %arg1: i32, %arg2: i32) -> (i32, i32) {
    %c0_i32 = arith.constant 0 : i32
    %c0_i32_0 = arith.constant 0 : i32
    return %c0_i32, %arg1 : i32, i32
  }
  func.func @transform_3(%arg0: i32, %arg1: i32, %arg2: i32) -> (i32, i32) {
    %c0_i32 = arith.constant 0 : i32
    return %arg0, %arg1 : i32, i32
  }
  func.func @transform_4(%arg0: i32, %arg1: i32, %arg2: i32) -> (i32, i32) {
    %c0_i32 = arith.constant 0 : i32
    return %arg0, %arg1 : i32, i32
  }
}

</mosaic_0001>

<llo_original>
// kernel: tpu_custom_call.1
$region0: #{tpu_custom_call.1}
  #allocation0 [shape = 'u32[]', space=smem, size = 0x4, offset = 0x4, fixed_abs, tag = 'smem constant byte address 0x4 - core index']
  #allocation1 [shape = 'u32[144,128]{1,0:T(1,128)}', space=vmem, size = 0x12000, scoped, tag = 'internal scratch']
  #allocation2 [shape = 'f32[16,128]{1,0:T(8,128)}', space=vmem, size = 0x2000, scoped, tag = 'scratch operand']
  %s0 = inlined_call_operand.hbm [shape: bf16[16,128], index: 0, kind: input, shape index: {}]
  %s1 = inlined_call_operand.hbm [shape: bf16[128,128], index: 1, kind: input, shape index: {}]
  %s2 = inlined_call_operand.vmem [shape: f32[1,128], index: 2, kind: input, shape index: {}]
  %s3 = inlined_call_operand.hbm [shape: f32[16,128], index: 3, kind: input, shape index: {}]
  %s4 = inlined_call_operand.hbm [shape: f32[16,128], index: 4, kind: output, shape index: {}]
  %s5 = sld [smem:[#allocation0]]
  $region46: #{tpu_custom_call.1} parent=0
    _
  %s7 = ssub.s32 1, %s5
  %s8 = scalar_select 0, %s7, %s5
  $region1: #{tpu_custom_call.1} parent=0
    #allocation3 [shape = 'u8[4096]{0}', space=vmem, size = 0x1000, scoped, tag = 'input window, operand 0, single buffered']
    #allocation4 [shape = 's32[1]{0}', space=sflag, size = 0x4, scoped, tag = 'scoped memory for tpu_custom_call.1']
    #allocation5 [shape = 's32[1]{0}', space=sflag, size = 0x4, scoped, tag = 'scoped memory for tpu_custom_call.1']
    #allocation6 [shape = 'u8[32768]{0}', space=vmem, size = 0x8000, scoped, tag = 'input window, operand 1, single buffered']
    #allocation7 [shape = 's32[1]{0}', space=sflag, size = 0x4, scoped, tag = 'scoped memory for tpu_custom_call.1']
    #allocation8 [shape = 'u8[8192]{0}', space=vmem, size = 0x2000, scoped, tag = 'input window, operand 3, single buffered']
    #allocation9 [shape = 'u8[8192]{0}', space=vmem, size = 0x2000, scoped, tag = 'output window, operand 0, single buffered']
    %9 = vsyncpa [#allocation4], 0
    %10 = vsyncpa [#allocation7], 0
    %11 = vsyncpa [#allocation5], 0
    // Predicated region
    $region2: #{tpu_custom_call.1} parent=1 // pred_check
      _
    $region3: #{tpu_custom_call.1} parent=1 // pred_check_branch
      %13 = sbr.rel (0) target = $region5
    $region4: #{tpu_custom_call.1} parent=1 // pred_region
      %s15 = ssub.s32 128, 128
      %16 = vsyncadd [#allocation4], %s15
      %s17 = sshll.u32 [#allocation3], 4
      %s18 = int_to_ptr.vmem [resolvable:$true] %s17
      %23 = dma.hbm_to_vmem [thread:$0]  %s0, 128, %s18, [#allocation4], 64, 64, 4
    $region5: #{tpu_custom_call.1} parent=1 // pred_fallthru
      _
    // Predicated region
    $region6: #{tpu_custom_call.1} parent=1 // pred_check
      _
    $region7: #{tpu_custom_call.1} parent=1 // pred_check_branch
      %25 = sbr.rel (0) target = $region9
    $region8: #{tpu_custom_call.1} parent=1 // pred_region
      %s27 = ssub.s32 1024, 1024
      %28 = vsyncadd [#allocation7], %s27
      %s29 = sshll.u32 [#allocation6], 4
      %s30 = int_to_ptr.vmem [resolvable:$true] %s29
      %35 = dma.hbm_to_vmem [thread:$0]  %s1, 1024, %s30, [#allocation7], 64, 64, 4
    $region9: #{tpu_custom_call.1} parent=1 // pred_fallthru
      _
    // Predicated region
    $region10: #{tpu_custom_call.1} parent=1 // pred_check
      _
    $region11: #{tpu_custom_call.1} parent=1 // pred_check_branch
      %37 = sbr.rel (0) target = $region13
    $region12: #{tpu_custom_call.1} parent=1 // pred_region
      _
    $region13: #{tpu_custom_call.1} parent=1 // pred_fallthru
      _
    // Predicated region
    $region14: #{tpu_custom_call.1} parent=1 // pred_check
      _
    $region15: #{tpu_custom_call.1} parent=1 // pred_check_branch
      %39 = sbr.rel (0) target = $region17
    $region16: #{tpu_custom_call.1} parent=1 // pred_region
      %s41 = ssub.s32 256, 256
      %42 = vsyncadd [#allocation7], %s41
      %s43 = sshll.u32 [#allocation8], 4
      %s44 = int_to_ptr.vmem [resolvable:$true] %s43
      %49 = dma.hbm_to_vmem [thread:$0]  %s3, 256, %s44, [#allocation7], 128, 128, 8
    $region17: #{tpu_custom_call.1} parent=1 // pred_fallthru
      _
    // Predicated region
    $region18: #{tpu_custom_call.1} parent=1 // pred_check
      _
    $region19: #{tpu_custom_call.1} parent=1 // pred_check_branch
      %51 = sbr.rel (0) target = $region21
    $region20: #{tpu_custom_call.1} parent=1 // pred_region
      %52 = dma.done [#allocation4], 128
    $region21: #{tpu_custom_call.1} parent=1 // pred_fallthru
      _
    // Predicated region
    $region22: #{tpu_custom_call.1} parent=1 // pred_check
      _
    $region23: #{tpu_custom_call.1} parent=1 // pred_check_branch
      %54 = sbr.rel (0) target = $region25
    $region24: #{tpu_custom_call.1} parent=1 // pred_region
      %55 = dma.done [#allocation7], 1024
    $region25: #{tpu_custom_call.1} parent=1 // pred_fallthru
      _
    // Predicated region
    $region26: #{tpu_custom_call.1} parent=1 // pred_check
      _
    $region27: #{tpu_custom_call.1} parent=1 // pred_check_branch
      %57 = sbr.rel (0) target = $region29
    $region28: #{tpu_custom_call.1} parent=1 // pred_region
      %58 = dma.done [#allocation7], 256
    $region29: #{tpu_custom_call.1} parent=1 // pred_fallthru
      _
    %p60 = scmp.eq.s32.totalorder 0, 0
    // Predicated region
    $region30: #{tpu_custom_call.1} parent=1 // pred_check
      %p61 = pneg %p60
    $region31: #{tpu_custom_call.1} parent=1 // pred_check_branch
      %63 = sbr.rel (%p61) target = $region33
    $region32: #{tpu_custom_call.1} parent=1 // pred_region
      %64 = vst [vmem:[#allocation2] sm:$0xff] 0.0
      %65 = vst [vmem:[#allocation2 + $0x8] sm:$0xff] 0.0
    $region33: #{tpu_custom_call.1} parent=1 // pred_fallthru
      _
    %v66 = vld [vmem:[#allocation2] sm:$0xff]
    %v67 = vld [vmem:[#allocation2 + $0x8] sm:$0xff]
    %v68 = vld [vmem:[#allocation3] sm:$0xf]
    %v69 = vld [vmem:[#allocation3 + $0x4] sm:$0xf]
    %v70 = vld [vmem:[#allocation6] sm:$0xf]
    %v71 = vld [vmem:[#allocation6 + $0x4] sm:$0xf]
    %v72 = vld [vmem:[#allocation6 + $0x8] sm:$0xf]
    %v73 = vld [vmem:[#allocation6 + $0xc] sm:$0xf]
    %v74 = vld [vmem:[#allocation6 + $0x10] sm:$0xf]
    %v75 = vld [vmem:[#allocation6 + $0x14] sm:$0xf]
    %v76 = vld [vmem:[#allocation6 + $0x18] sm:$0xf]
    %v77 = vld [vmem:[#allocation6 + $0x1c] sm:$0xf]
    %v78 = vld [vmem:[#allocation6 + $0x20] sm:$0xf]
    %v79 = vld [vmem:[#allocation6 + $0x24] sm:$0xf]
    %v80 = vld [vmem:[#allocation6 + $0x28] sm:$0xf]
    %v81 = vld [vmem:[#allocation6 + $0x2c] sm:$0xf]
    %v82 = vld [vmem:[#allocation6 + $0x30] sm:$0xf]
    %v83 = vld [vmem:[#allocation6 + $0x34] sm:$0xf]
    %v84 = vld [vmem:[#allocation6 + $0x38] sm:$0xf]
    %v85 = vld [vmem:[#allocation6 + $0x3c] sm:$0xf]
    %v88 = vunpack.c.l.b16 %v68
    %v89 = vunpack.c.l.b16 %v69
    %v90 = vpack.c.b16 %v89, %v88
    %v108 = vunpack.c.l.b16 %v70
    %v109 = vunpack.c.l.b16 %v71
    %v110 = vunpack.c.l.b16 %v72
    %v111 = vunpack.c.l.b16 %v73
    %v112 = vunpack.c.l.b16 %v74
    %v113 = vunpack.c.l.b16 %v75
    %v114 = vunpack.c.l.b16 %v76
    %v115 = vunpack.c.l.b16 %v77
    %v116 = vunpack.c.l.b16 %v78
    %v117 = vunpack.c.l.b16 %v79
    %v118 = vunpack.c.l.b16 %v80
    %v119 = vunpack.c.l.b16 %v81
    %v120 = vunpack.c.l.b16 %v82
    %v121 = vunpack.c.l.b16 %v83
    %v122 = vunpack.c.l.b16 %v84
    %v123 = vunpack.c.l.b16 %v85
    %v124 = vpack.c.b16 %v109, %v108
    %v125 = vpack.c.b16 %v111, %v110
    %v126 = vpack.c.b16 %v113, %v112
    %v127 = vpack.c.b16 %v115, %v114
    %v128 = vpack.c.b16 %v117, %v116
    %v129 = vpack.c.b16 %v119, %v118
    %v130 = vpack.c.b16 %v121, %v120
    %v131 = vpack.c.b16 %v123, %v122
    %140 = vmatprep.subr.bf16.mxu0 0
    %141 = vmatpush1.bf16.msra.mxu0 %v124
    %142 = vmatprep.subr.bf16.mxu0 0
    %143 = vmatpush1.bf16.msra.mxu0 %v125
    %144 = vmatprep.subr.bf16.mxu0 0
    %145 = vmatpush1.bf16.msra.mxu0 %v126
    %146 = vmatprep.subr.bf16.mxu0 0
    %147 = vmatpush1.bf16.msra.mxu0 %v127
    %148 = vmatprep.subr.bf16.mxu0 0
    %149 = vmatpush1.bf16.msra.mxu0 %v128
    %150 = vmatprep.subr.bf16.mxu0 0
    %151 = vmatpush1.bf16.msra.mxu0 %v129
    %152 = vmatprep.subr.bf16.mxu0 0
    %153 = vmatpush1.bf16.msra.mxu0 %v130
    %154 = vmatprep.subr.bf16.mxu0 0
    %155 = vmatpush1.bf16.msra.mxu0 %v131
    %156 = vmatprep.subr.bf16.mxu0 0
    %157 = vmatpush1.bf16.msra.mxu0 0
    %158 = vmatprep.subr.bf16.mxu0 0
    %159 = vmatpush1.bf16.msra.mxu0 0
    %160 = vmatprep.subr.bf16.mxu0 0
    %161 = vmatpush1.bf16.msra.mxu0 0
    %162 = vmatprep.subr.bf16.mxu0 0
    %163 = vmatpush1.bf16.msra.mxu0 0
    %164 = vmatprep.subr.bf16.mxu0 0
    %165 = vmatpush1.bf16.msra.mxu0 0
    %166 = vmatprep.subr.bf16.mxu0 0
    %167 = vmatpush1.bf16.msra.mxu0 0
    %168 = vmatprep.subr.bf16.mxu0 0
    %169 = vmatpush1.bf16.msra.mxu0 0
    %170 = vmatprep.subr.bf16.mxu0 0
    %171 = vmatpush1.bf16.msra.mxu0 0
    %172 = vmatprep.mubr.bf16.mxu0 0
    %173 = vmatmul.mubr.bf16.gmra.mrb[0].mxu0 %v90
    %v174 = vpop.f32.mrb[0].mxu0
    %v175 = vadd.f32 0.0, %v174
    %v176 = vpop.f32.mrb[0].mxu0
    %v177 = vpop.f32.mrb[0].mxu0
    %v178 = vadd.f32 0.0, %v177
    %v179 = vpop.f32.mrb[0].mxu0
    %180 = vdwg.mxu0
    %v181 = vadd.f32 %v66, %v175
    %v182 = vadd.f32 %v67, %v178
    %183 = vst [vmem:[#allocation2] sm:$0xff] %v181
    %184 = vst [vmem:[#allocation2 + $0x8] sm:$0xff] %v182
    // Predicated region
    $region34: #{tpu_custom_call.1} parent=1 // pred_check
      %p185 = pneg %p60
    $region35: #{tpu_custom_call.1} parent=1 // pred_check_branch
      %187 = sbr.rel (%p185) target = $region37
    $region36: #{tpu_custom_call.1} parent=1 // pred_region
      %v188 = vld [vmem:[#allocation2] sm:$0xff]
      %v189 = vld [vmem:[#allocation2 + $0x8] sm:$0xff]
      %v190 = vld [vmem:[%s2] sm:$0x1]
      %v192 = vlaneseq
      %v193 = vshrl.u32 %v192, 7
      %v194 = vsub.s32 0, %v193
      %v195 = vrot.slane %v190, %v194
      %v197 = vadd.f32 %v188, %v195
      %v198 = vadd.f32 %v189, %v195
      %v199 = vld [vmem:[#allocation8] sm:$0xff]
      %v200 = vld [vmem:[#allocation8 + $0x8] sm:$0xff]
      %v201 = vadd.f32 %v197, %v199
      %v202 = vadd.f32 %v198, %v200
      %203 = vst [vmem:[#allocation9] sm:$0xff] %v201
      %204 = vst [vmem:[#allocation9 + $0x8] sm:$0xff] %v202
    $region37: #{tpu_custom_call.1} parent=1 // pred_fallthru
      _
    // Predicated region
    $region38: #{tpu_custom_call.1} parent=1 // pred_check
      _
    $region39: #{tpu_custom_call.1} parent=1 // pred_check_branch
      %206 = sbr.rel (0) target = $region41
    $region40: #{tpu_custom_call.1} parent=1 // pred_region
      %s208 = ssub.s32 256, 256
      %209 = vsyncadd [#allocation5], %s208
      %s210 = sshll.u32 [#allocation9], 4
      %s211 = int_to_ptr.vmem [resolvable:$true] %s210
      %216 = dma.vmem_to_hbm [thread:$0]  %s211, 256, %s4, [#allocation5], 128, 128, 8
    $region41: #{tpu_custom_call.1} parent=1 // pred_fallthru
      _
    // Predicated region
    $region42: #{tpu_custom_call.1} parent=1 // pred_check
      _
    $region43: #{tpu_custom_call.1} parent=1 // pred_check_branch
      %218 = sbr.rel (0) target = $region45
    $region44: #{tpu_custom_call.1} parent=1 // pred_region
      %219 = dma.done [#allocation5], 256
    $region45: #{tpu_custom_call.1} parent=1 // pred_fallthru
      _
    %220 = vsyncpa [#allocation4], 1
    %221 = vsyncpa [#allocation7], 1
    %222 = vsyncpa [#allocation5], 1

</llo_original>
